<compile_context>
chip_gen: v5e
topology: v5e:2x2
jax: 0.10.0
libtpu: 0.0.40
codegen_flags: <defaults>
</compile_context>

<pallas_src>
import jax
import jax.numpy as jnp
from jax.experimental import pallas as pl
from jax.experimental.pallas import tpu as pltpu


def _round_up(v, m):
    return (v + m - 1) // m * m


# ---------------------------------------------------------------------------
# Pass-1 kernels: batch-tiled x @ W with resident weight; per-column partial
# sum / sum-of-squares sub-reduced to an (8, D_out) resident block per shard.
# No row masking: padded rows are exactly zero (bias dropped), contribute 0.
# ---------------------------------------------------------------------------
def _stats_only_kernel(x_ref, w_ref, sum_ref, ssq_ref):
    j = pl.program_id(1)
    y = jnp.dot(x_ref[...], w_ref[...], preferred_element_type=jnp.float32)

    @pl.when(j == 0)
    def _init():
        sum_ref[...] = jnp.zeros_like(sum_ref)
        ssq_ref[...] = jnp.zeros_like(ssq_ref)

    # Sub-reduce over groups of 8 rows (sublane-aligned); final reduction of
    # the 8 rows (and across shards) happens in the tiny JAX stats block.
    y3 = y.reshape(-1, 8, y.shape[-1])
    sum_ref[...] += jnp.sum(y3, axis=0)
    ssq_ref[...] += jnp.sum(y3 * y3, axis=0)


def _matmul_stats_kernel(x_ref, w_ref, y_ref, sum_ref, ssq_ref):
    j = pl.program_id(1)
    y = jnp.dot(x_ref[...], w_ref[...], preferred_element_type=jnp.float32)
    y_ref[...] = y.astype(y_ref.dtype)

    @pl.when(j == 0)
    def _init():
        sum_ref[...] = jnp.zeros_like(sum_ref)
        ssq_ref[...] = jnp.zeros_like(ssq_ref)

    y3 = y.reshape(-1, 8, y.shape[-1])
    sum_ref[...] += jnp.sum(y3, axis=0)
    ssq_ref[...] += jnp.sum(y3 * y3, axis=0)


# ---------------------------------------------------------------------------
# Pass-2 kernels: fused normalize + affine + ReLU (one FMA + max per element).
# ---------------------------------------------------------------------------
def _matmul_norm_relu_kernel(x_ref, w_ref, scale_ref, shift_ref, o_ref):
    y = jnp.dot(x_ref[...], w_ref[...], preferred_element_type=jnp.float32)
    o_ref[...] = jnp.maximum(
        y * scale_ref[...] + shift_ref[...], 0.0
    ).astype(o_ref.dtype)


def _norm_relu_kernel(y_ref, scale_ref, shift_ref, o_ref):
    y = y_ref[...].astype(jnp.float32)
    o_ref[...] = jnp.maximum(
        y * scale_ref[...] + shift_ref[...], 0.0
    ).astype(o_ref.dtype)


def liner_module_forward(x, w, b, gamma, beta, *, eps=1e-5, tm=None,
                         compute_dtype=None, y_dtype=jnp.float32,
                         stat_shards=2,
                         vmem_budget_bytes=48 * 1024 * 1024):
    """Forward of Liner_Module.

    x:      (N, D_in) float32
    w:      (D_out, D_in)  (PyTorch nn.Linear layout)
    b:      (D_out,)       -- accepted for interface parity; it is exactly
                              cancelled by training-mode BN mean subtraction.
    gamma:  (D_out,)  BN weight
    beta:   (D_out,)  BN bias
    """
    del b  # mathematically dead: BN(y + b) == BN(y) in training mode
    n, d_in = x.shape
    d_out = w.shape[0]

    # Lane-dense padding (multiples of 128 on the minor dims).
    d_in_p = _round_up(d_in, 128)
    d_out_p = _round_up(d_out, 128)

    xdt = x.dtype if compute_dtype is None else compute_dtype
    xbytes = jnp.dtype(xdt).itemsize
    ybytes = jnp.dtype(y_dtype).itemsize

    # Drop the y HBM intermediate (recompute x@W in pass 2) when that is the
    # cheaper HBM traffic: re-reading x (+W, resident) vs write+read of y.
    recompute = d_in_p * xbytes <= 2 * d_out_p * ybytes

    def _vmem_need(tm_):
        w_buf = 2 * d_in_p * d_out_p * xbytes        # resident W (2 bufs alloc)
        x_buf = 2 * tm_ * d_in_p * xbytes            # x tile, double-buffered
        o_buf = 2 * tm_ * d_out_p * 4                # f32 output tile
        stats = 4 * 2 * 8 * d_out_p * 4              # sum/ssq blocks
        small = 4 * 8 * d_out_p * 4                  # scale/shift blocks
        if recompute:
            p1 = x_buf + w_buf + stats
            p2 = x_buf + w_buf + o_buf + small
        else:
            y_buf = 2 * tm_ * d_out_p * ybytes
            p1 = x_buf + w_buf + y_buf + stats
            p2 = y_buf + o_buf + small
        return max(p1, p2) + (1 << 20)               # fudge for metadata

    # Batch tile: largest power-of-two tile that fits the VMEM budget
    # (mem-bound kernels need >=512 rows to approach the HBM roofline),
    # clamped to the (8-padded) batch and kept a multiple of 8 sublanes.
    if tm is None:
        tm = 8
        for cand in (2048, 1024, 512, 256, 128, 64, 32, 16, 8):
            if _vmem_need(cand) <= vmem_budget_bytes:
                tm = cand
                break
    tm = max(8, min(_round_up(int(tm), 8), _round_up(n, 8)))

    need = _vmem_need(tm)
    # Derived VMEM limit; keep a safe cap for v7x's 64 MiB physical VMEM.
    vmem_limit = int(max(min(need + (8 << 20), 56 * 1024 * 1024), need))

    # Grid: leading "parallel" shard axis (per-core partial stats, used by
    # v7x's 2 TensorCores), inner "arbitrary" batch-tile axis.
    n_tiles = -(-n // tm)
    shards = max(1, min(int(stat_shards), n_tiles))
    tiles_per_shard = -(-n_tiles // shards)
    n_tiles = shards * tiles_per_shard
    n_p = n_tiles * tm

    x_p = jnp.zeros((n_p, d_in_p), xdt).at[:n, :d_in].set(x.astype(xdt))
    w_t = jnp.zeros((d_in_p, d_out_p), xdt).at[:d_in, :d_out].set(
        w.T.astype(xdt))

    x_spec1 = pl.BlockSpec((tm, d_in_p),
                           lambda s, j: (s * tiles_per_shard + j, 0))
    w_spec1 = pl.BlockSpec((d_in_p, d_out_p), lambda s, j: (0, 0))
    stats_spec = pl.BlockSpec((8, d_out_p), lambda s, j: (s, 0))
    stats_shape = jax.ShapeDtypeStruct((shards * 8, d_out_p), jnp.float32)

    # ---- Pass 1: tiled matmul + per-shard column sum / sum-of-squares ------
    if recompute:
        part_sum, part_ssq = pl.pallas_call(
            _stats_only_kernel,
            grid=(shards, tiles_per_shard),
            in_specs=[x_spec1, w_spec1],
            out_specs=(stats_spec, stats_spec),
            out_shape=(stats_shape, stats_shape),
            compiler_params=pltpu.CompilerParams(
                dimension_semantics=("parallel", "arbitrary"),
                vmem_limit_bytes=vmem_limit),
        )(x_p, w_t)
        y_p = None
    else:
        y_p, part_sum, part_ssq = pl.pallas_call(
            _matmul_stats_kernel,
            grid=(shards, tiles_per_shard),
            in_specs=[x_spec1, w_spec1],
            out_specs=(
                pl.BlockSpec((tm, d_out_p),
                             lambda s, j: (s * tiles_per_shard + j, 0)),
                stats_spec, stats_spec),
            out_shape=(
                jax.ShapeDtypeStruct((n_p, d_out_p), y_dtype),
                stats_shape, stats_shape),
            compiler_params=pltpu.CompilerParams(
                dimension_semantics=("parallel", "arbitrary"),
                vmem_limit_bytes=vmem_limit),
        )(x_p, w_t)

    # ---- Tiny statistics math in plain JAX ----------------------------------
    inv_n = 1.0 / n                                   # true batch N, not n_p
    col_sum = jnp.sum(part_sum, axis=0, keepdims=True)   # (1, d_out_p)
    col_ssq = jnp.sum(part_ssq, axis=0, keepdims=True)
    mean = col_sum * inv_n
    var = jnp.maximum(col_ssq * inv_n - mean * mean, 0.0)
    inv_std = jax.lax.rsqrt(var + eps)
    gamma_p = jnp.zeros((1, d_out_p), jnp.float32).at[0, :d_out].set(
        gamma.astype(jnp.float32))
    beta_p = jnp.zeros((1, d_out_p), jnp.float32).at[0, :d_out].set(
        beta.astype(jnp.float32))
    scale = gamma_p * inv_std
    shift = beta_p - mean * scale

    # ---- Pass 2: fused (matmul +) normalize + affine + ReLU -----------------
    if recompute:
        out = pl.pallas_call(
            _matmul_norm_relu_kernel,
            grid=(n_tiles,),
            in_specs=[
                pl.BlockSpec((tm, d_in_p), lambda i: (i, 0)),
                pl.BlockSpec((d_in_p, d_out_p), lambda i: (0, 0)),
                pl.BlockSpec((1, d_out_p), lambda i: (0, 0)),
                pl.BlockSpec((1, d_out_p), lambda i: (0, 0)),
            ],
            out_specs=pl.BlockSpec((tm, d_out_p), lambda i: (i, 0)),
            out_shape=jax.ShapeDtypeStruct((n_p, d_out_p), jnp.float32),
            compiler_params=pltpu.CompilerParams(
                dimension_semantics=("parallel",),
                vmem_limit_bytes=vmem_limit),
        )(x_p, w_t, scale, shift)
    else:
        aliases = ({0: 0}
                   if jnp.dtype(y_dtype) == jnp.dtype(jnp.float32) else {})
        out = pl.pallas_call(
            _norm_relu_kernel,
            grid=(n_tiles,),
            in_specs=[
                pl.BlockSpec((tm, d_out_p), lambda i: (i, 0)),
                pl.BlockSpec((1, d_out_p), lambda i: (0, 0)),
                pl.BlockSpec((1, d_out_p), lambda i: (0, 0)),
            ],
            out_specs=pl.BlockSpec((tm, d_out_p), lambda i: (i, 0)),
            out_shape=jax.ShapeDtypeStruct((n_p, d_out_p), jnp.float32),
            input_output_aliases=aliases,
            compiler_params=pltpu.CompilerParams(
                dimension_semantics=("parallel",),
                vmem_limit_bytes=vmem_limit),
        )(y_p, scale, shift)

    return out[:n, :d_out]


if __name__ == "__main__":
    # Small shapes consistent with the module; batch deliberately NOT a
    # multiple of 8/128 so the padding paths are exercised.
    batch, input_dim, out_dim = 200, 32, 16

    key = jax.random.PRNGKey(0)
    k_x, k_w, k_b = jax.random.split(key, 3)

    x = jax.random.normal(k_x, (batch, input_dim), dtype=jnp.float32)

    # Deterministic parameter init (mimics nn.Linear default uniform bound).
    bound = 1.0 / (input_dim ** 0.5)
    w = jax.random.uniform(k_w, (out_dim, input_dim), jnp.float32, -bound, bound)
    b = jax.random.uniform(k_b, (out_dim,), jnp.float32, -bound, bound)
    # BatchNorm1d default affine params.
    gamma = jnp.ones((out_dim,), jnp.float32)
    beta = jnp.zeros((out_dim,), jnp.float32)

    out = liner_module_forward(x, w, b, gamma, beta)
    jax.block_until_ready(out)

    # Reference in plain JAX (training-mode BN semantics, bias included —
    # it cancels, so the kernel's bias-free path must match).
    y_ref = x @ w.T + b
    mean = y_ref.mean(axis=0, keepdims=True)
    var = ((y_ref - mean) ** 2).mean(axis=0, keepdims=True)
    ref = jnp.maximum((y_ref - mean) / jnp.sqrt(var + 1e-5) * gamma + beta, 0.0)

    assert out.shape == ref.shape
    assert jnp.allclose(out, ref, atol=1e-4, rtol=1e-4), "mismatch vs reference"
    print("KERNEL_OK")
</pallas_src>

<mosaic_0001>
module attributes {stable_mosaic.version = 11 : i64} {
  func.func @_stats_only_kernel(%arg0: i32, %arg1: i32, %arg2: memref<200x128xf32, #tpu.memory_space<vmem>>, %arg3: memref<128x128xf32, #tpu.memory_space<vmem>>, %arg4: memref<8x128xf32, #tpu.memory_space<vmem>>, %arg5: memref<8x128xf32, #tpu.memory_space<vmem>>) attributes {dimension_semantics = [#tpu.dimension_semantics<parallel>, #tpu.dimension_semantics<arbitrary>], iteration_bounds = array<i64: 1, 1>, scalar_prefetch = 0 : i64, scratch_operands = 0 : i64, tpu.core_type = #tpu.core_type<tc>, window_params = [{transform_indices = @transform_0, window_bounds = array<i64: 200, 128>}, {pipeline_mode = #tpu.pipeline_mode<synchronous>, transform_indices = @transform_1, window_bounds = array<i64: 128, 128>}, {transform_indices = @transform_2, window_bounds = array<i64: 8, 128>}, {transform_indices = @transform_3, window_bounds = array<i64: 8, 128>}]} {
    %c0 = arith.constant 0 : index
    %c0_0 = arith.constant 0 : index
    %0 = vector.load %arg2[%c0, %c0_0] : memref<200x128xf32, #tpu.memory_space<vmem>>, vector<200x128xf32>
    %c0_1 = arith.constant 0 : index
    %c0_2 = arith.constant 0 : index
    %1 = vector.load %arg3[%c0_1, %c0_2] : memref<128x128xf32, #tpu.memory_space<vmem>>, vector<128x128xf32>
    %cst = arith.constant dense<0.000000e+00> : vector<200x128xf32>
    %2 = tpu.matmul %0, %1, %cst {dimension_numbers = #tpu.dot_dimension_numbers<[1], [0], [0], [1], [0, 0, 1, 1], [], []>} : vector<200x128xf32>, vector<128x128xf32>, vector<200x128xf32> -> vector<200x128xf32>
    %c0_i32 = arith.constant 0 : i32
    %3 = arith.cmpi eq, %arg1, %c0_i32 : i32
    %4 = arith.extui %3 : i1 to i32
    %c0_i32_3 = arith.constant 0 : i32
    %5 = arith.cmpi ne, %4, %c0_i32_3 : i32
    scf.if %5 {
      %cst_14 = arith.constant 0.000000e+00 : f32
      %16 = vector.broadcast %cst_14 : f32 to vector<8x128xf32>
      %c0_15 = arith.constant 0 : index
      %c0_16 = arith.constant 0 : index
      %17 = vector.load %arg4[%c0_15, %c0_16] : memref<8x128xf32, #tpu.memory_space<vmem>>, vector<8x128xf32>
      tpu.vector_store %arg4[%c0_15, %c0_16], %16 {strides = array<i32>} : memref<8x128xf32, #tpu.memory_space<vmem>>, vector<8x128xf32>,
      %cst_17 = arith.constant 0.000000e+00 : f32
      %18 = vector.broadcast %cst_17 : f32 to vector<8x128xf32>
      %c0_18 = arith.constant 0 : index
      %c0_19 = arith.constant 0 : index
      %19 = vector.load %arg5[%c0_18, %c0_19] : memref<8x128xf32, #tpu.memory_space<vmem>>, vector<8x128xf32>
      tpu.vector_store %arg5[%c0_18, %c0_19], %18 {strides = array<i32>} : memref<8x128xf32, #tpu.memory_space<vmem>>, vector<8x128xf32>,
    } else {
    }
    %6 = vector.shape_cast %2 : vector<200x128xf32> to vector<25x8x128xf32>
    %c0_4 = arith.constant 0 : index
    %c0_5 = arith.constant 0 : index
    %7 = vector.load %arg4[%c0_4, %c0_5] : memref<8x128xf32, #tpu.memory_space<vmem>>, vector<8x128xf32>
    %cst_6 = arith.constant dense<0.000000e+00> : vector<8x128xf32>
    %8 = vector.multi_reduction <add>, %6, %cst_6 [0] : vector<25x8x128xf32> to vector<8x128xf32>
    %9 = arith.addf %7, %8 : vector<8x128xf32>
    %c0_7 = arith.constant 0 : index
    %c0_8 = arith.constant 0 : index
    %10 = vector.load %arg4[%c0_7, %c0_8] : memref<8x128xf32, #tpu.memory_space<vmem>>, vector<8x128xf32>
    tpu.vector_store %arg4[%c0_7, %c0_8], %9 {strides = array<i32>} : memref<8x128xf32, #tpu.memory_space<vmem>>, vector<8x128xf32>,
    %c0_9 = arith.constant 0 : index
    %c0_10 = arith.constant 0 : index
    %11 = vector.load %arg5[%c0_9, %c0_10] : memref<8x128xf32, #tpu.memory_space<vmem>>, vector<8x128xf32>
    %12 = arith.mulf %6, %6 : vector<25x8x128xf32>
    %cst_11 = arith.constant dense<0.000000e+00> : vector<8x128xf32>
    %13 = vector.multi_reduction <add>, %12, %cst_11 [0] : vector<25x8x128xf32> to vector<8x128xf32>
    %14 = arith.addf %11, %13 : vector<8x128xf32>
    %c0_12 = arith.constant 0 : index
    %c0_13 = arith.constant 0 : index
    %15 = vector.load %arg5[%c0_12, %c0_13] : memref<8x128xf32, #tpu.memory_space<vmem>>, vector<8x128xf32>
    tpu.vector_store %arg5[%c0_12, %c0_13], %14 {strides = array<i32>} : memref<8x128xf32, #tpu.memory_space<vmem>>, vector<8x128xf32>,
    return
  }
  func.func @transform_0(%arg0: i32, %arg1: i32) -> (i32, i32) {
    %c1_i32 = arith.constant 1 : i32
    %0 = arith.muli %arg0, %c1_i32 : i32
    %1 = arith.addi %0, %arg1 : i32
    %c0_i32 = arith.constant 0 : i32
    %c0_i32_0 = arith.constant 0 : i32
    return %1, %c0_i32 : i32, i32
  }
  func.func @transform_1(%arg0: i32, %arg1: i32) -> (i32, i32) {
    %c0_i32 = arith.constant 0 : i32
    %c0_i32_0 = arith.constant 0 : i32
    %c0_i32_1 = arith.constant 0 : i32
    return %c0_i32, %c0_i32_0 : i32, i32
  }
  func.func @transform_2(%arg0: i32, %arg1: i32) -> (i32, i32) {
    %c0_i32 = arith.constant 0 : i32
    %c0_i32_0 = arith.constant 0 : i32
    return %arg0, %c0_i32 : i32, i32
  }
  func.func @transform_3(%arg0: i32, %arg1: i32) -> (i32, i32) {
    %c0_i32 = arith.constant 0 : i32
    %c0_i32_0 = arith.constant 0 : i32
    return %arg0, %c0_i32 : i32, i32
  }
}

</mosaic_0001>

<llo_original>
// kernel: tpu_custom_call.1
$region0: #{tpu_custom_call.1}
  #allocation0 [shape = 'u32[]', space=smem, size = 0x4, offset = 0x4, fixed_abs, tag = 'smem constant byte address 0x4 - core index']
  #allocation1 [shape = 'u32[72,128]{1,0:T(1,128)}', space=vmem, size = 0x9000, scoped, tag = 'internal scratch']
  %s0 = inlined_call_operand.hbm [shape: f32[200,128], index: 0, kind: input, shape index: {}]
  %s1 = inlined_call_operand.hbm [shape: f32[128,128], index: 1, kind: input, shape index: {}]
  %s2 = inlined_call_operand.hbm [shape: f32[8,128], index: 2, kind: output, shape index: {0}]
  %s3 = inlined_call_operand.hbm [shape: f32[8,128], index: 3, kind: output, shape index: {1}]
  %4 = xla_tuple %s2, %s3
  %s5 = sld [smem:[#allocation0]]
  $region38: #{tpu_custom_call.1} parent=0
    _
  %s7 = ssub.s32 1, %s5
  %s8 = scalar_select 0, %s7, %s5
  $region1: #{tpu_custom_call.1} parent=0
    #allocation2 [shape = 'u8[102400]{0}', space=vmem, size = 0x19000, scoped, tag = 'input window, operand 0, single buffered']
    #allocation3 [shape = 's32[1]{0}', space=sflag, size = 0x4, scoped, tag = 'scoped memory for tpu_custom_call.1']
    #allocation4 [shape = 's32[1]{0}', space=sflag, size = 0x4, scoped, tag = 'scoped memory for tpu_custom_call.1']
    #allocation5 [shape = 'u8[65536]{0}', space=vmem, size = 0x10000, scoped, tag = 'input window, operand 1, single buffered']
    #allocation6 [shape = 's32[1]{0}', space=sflag, size = 0x4, scoped, tag = 'scoped memory for tpu_custom_call.1']
    #allocation7 [shape = 'u8[4096]{0}', space=vmem, size = 0x1000, scoped, tag = 'output window, operand 0, single buffered']
    #allocation8 [shape = 'u8[4096]{0}', space=vmem, size = 0x1000, scoped, tag = 'output window, operand 1, single buffered']
    #allocation9 [shape = 's32[1]{0}', space=sflag, size = 0x4, scoped, tag = 'scoped memory for tpu_custom_call.1']
    %9 = vsyncpa [#allocation3], 0
    %10 = vsyncpa [#allocation6], 0
    %11 = vsyncpa [#allocation4], 0
    %12 = vsyncpa [#allocation9], 0
    // Predicated region
    $region2: #{tpu_custom_call.1} parent=1 // pred_check
      _
    $region3: #{tpu_custom_call.1} parent=1 // pred_check_branch
      %14 = sbr.rel (0) target = $region5
    $region4: #{tpu_custom_call.1} parent=1 // pred_region
      %s15 = sadd.s32 0, 0
      %s16 = smul.u32 25, %s15
      %18 = vsyncadd [#allocation3], 0
      %s19 = smul.addr %s16, 8
      %s20 = scalar_lea.hbm %s0, %s19
      %s21 = sshll.u32 %s20, 4
      %s22 = int_to_ptr.hbm [resolvable:$true] %s21
      %s23 = sshll.u32 [#allocation2], 4
      %s24 = int_to_ptr.vmem [resolvable:$true] %s23
      %29 = dma.hbm_to_vmem [thread:$0]  %s22, 3200, %s24, [#allocation3], 128, 128, 8
    $region5: #{tpu_custom_call.1} parent=1 // pred_fallthru
      _
    // Predicated region
    $region6: #{tpu_custom_call.1} parent=1 // pred_check
      _
    $region7: #{tpu_custom_call.1} parent=1 // pred_check_branch
      %31 = sbr.rel (0) target = $region9
    $region8: #{tpu_custom_call.1} parent=1 // pred_region
      %33 = vsyncadd [#allocation6], 0
      %s34 = sshll.u32 %s1, 4
      %s35 = int_to_ptr.hbm [resolvable:$true] %s34
      %s36 = sshll.u32 [#allocation5], 4
      %s37 = int_to_ptr.vmem [resolvable:$true] %s36
      %42 = dma.hbm_to_vmem [thread:$0]  %s35, 2048, %s37, [#allocation6], 128, 128, 8
    $region9: #{tpu_custom_call.1} parent=1 // pred_fallthru
      _
    // Predicated region
    $region10: #{tpu_custom_call.1} parent=1 // pred_check
      _
    $region11: #{tpu_custom_call.1} parent=1 // pred_check_branch
      %44 = sbr.rel (0) target = $region13
    $region12: #{tpu_custom_call.1} parent=1 // pred_region
      %46 = dma.done [#allocation3], 3200
    $region13: #{tpu_custom_call.1} parent=1 // pred_fallthru
      _
    // Predicated region
    $region14: #{tpu_custom_call.1} parent=1 // pred_check
      _
    $region15: #{tpu_custom_call.1} parent=1 // pred_check_branch
      %48 = sbr.rel (0) target = $region17
    $region16: #{tpu_custom_call.1} parent=1 // pred_region
      %50 = dma.done [#allocation6], 2048
    $region17: #{tpu_custom_call.1} parent=1 // pred_fallthru
      _
    %s51 = sadd.s32 0, 0
    %s52 = smul.u32 25, %s51
    %v53 = vld [vmem:[#allocation2] sm:$0xff]
    %v54 = vld [vmem:[#allocation2 + $0x8] sm:$0xff]
    %v55 = vld [vmem:[#allocation2 + $0x10] sm:$0xff]
    %v56 = vld [vmem:[#allocation2 + $0x18] sm:$0xff]
    %v57 = vld [vmem:[#allocation2 + $0x20] sm:$0xff]
    %v58 = vld [vmem:[#allocation2 + $0x28] sm:$0xff]
    %v59 = vld [vmem:[#allocation2 + $0x30] sm:$0xff]
    %v60 = vld [vmem:[#allocation2 + $0x38] sm:$0xff]
    %v61 = vld [vmem:[#allocation2 + $0x40] sm:$0xff]
    %v62 = vld [vmem:[#allocation2 + $0x48] sm:$0xff]
    %v63 = vld [vmem:[#allocation2 + $0x50] sm:$0xff]
    %v64 = vld [vmem:[#allocation2 + $0x58] sm:$0xff]
    %v65 = vld [vmem:[#allocation2 + $0x60] sm:$0xff]
    %v66 = vld [vmem:[#allocation2 + $0x68] sm:$0xff]
    %v67 = vld [vmem:[#allocation2 + $0x70] sm:$0xff]
    %v68 = vld [vmem:[#allocation2 + $0x78] sm:$0xff]
    %v69 = vld [vmem:[#allocation2 + $0x80] sm:$0xff]
    %v70 = vld [vmem:[#allocation2 + $0x88] sm:$0xff]
    %v71 = vld [vmem:[#allocation2 + $0x90] sm:$0xff]
    %v72 = vld [vmem:[#allocation2 + $0x98] sm:$0xff]
    %v73 = vld [vmem:[#allocation2 + $0xa0] sm:$0xff]
    %v74 = vld [vmem:[#allocation2 + $0xa8] sm:$0xff]
    %v75 = vld [vmem:[#allocation2 + $0xb0] sm:$0xff]
    %v76 = vld [vmem:[#allocation2 + $0xb8] sm:$0xff]
    %v77 = vld [vmem:[#allocation2 + $0xc0] sm:$0xff]
    %v78 = vld [vmem:[#allocation5] sm:$0xff]
    %v79 = vld [vmem:[#allocation5 + $0x8] sm:$0xff]
    %v80 = vld [vmem:[#allocation5 + $0x10] sm:$0xff]
    %v81 = vld [vmem:[#allocation5 + $0x18] sm:$0xff]
    %v82 = vld [vmem:[#allocation5 + $0x20] sm:$0xff]
    %v83 = vld [vmem:[#allocation5 + $0x28] sm:$0xff]
    %v84 = vld [vmem:[#allocation5 + $0x30] sm:$0xff]
    %v85 = vld [vmem:[#allocation5 + $0x38] sm:$0xff]
    %v86 = vld [vmem:[#allocation5 + $0x40] sm:$0xff]
    %v87 = vld [vmem:[#allocation5 + $0x48] sm:$0xff]
    %v88 = vld [vmem:[#allocation5 + $0x50] sm:$0xff]
    %v89 = vld [vmem:[#allocation5 + $0x58] sm:$0xff]
    %v90 = vld [vmem:[#allocation5 + $0x60] sm:$0xff]
    %v91 = vld [vmem:[#allocation5 + $0x68] sm:$0xff]
    %v92 = vld [vmem:[#allocation5 + $0x70] sm:$0xff]
    %v93 = vld [vmem:[#allocation5 + $0x78] sm:$0xff]
    %94 = vmatpush.msra.mxu0 %v93
    %95 = vmatpush.msra.mxu0 %v92
    %96 = vmatpush.msra.mxu0 %v91
    %97 = vmatpush.msra.mxu0 %v90
    %98 = vmatpush.msra.mxu0 %v89
    %99 = vmatpush.msra.mxu0 %v88
    %100 = vmatpush.msra.mxu0 %v87
    %101 = vmatpush.msra.mxu0 %v86
    %102 = vmatpush.msra.mxu0 %v85
    %103 = vmatpush.msra.mxu0 %v84
    %104 = vmatpush.msra.mxu0 %v83
    %105 = vmatpush.msra.mxu0 %v82
    %106 = vmatpush.msra.mxu0 %v81
    %107 = vmatpush.msra.mxu0 %v80
    %108 = vmatpush.msra.mxu0 %v79
    %109 = vmatpush.msra.mxu0 %v78
    %110 = vmatmul.f32.gmra.mxu0 %v53
    %v111 = vpop.f32.mrf.mxu0
    %v112 = vadd.f32 0.0, %v111
    %113 = vmatmul.f32.gmra.mxu0 %v54
    %v114 = vpop.f32.mrf.mxu0
    %v115 = vadd.f32 0.0, %v114
    %116 = vmatmul.f32.gmra.mxu0 %v55
    %v117 = vpop.f32.mrf.mxu0
    %v118 = vadd.f32 0.0, %v117
    %119 = vmatmul.f32.gmra.mxu0 %v56
    %v120 = vpop.f32.mrf.mxu0
    %v121 = vadd.f32 0.0, %v120
    %122 = vmatmul.f32.gmra.mxu0 %v57
    %v123 = vpop.f32.mrf.mxu0
    %v124 = vadd.f32 0.0, %v123
    %125 = vmatmul.f32.gmra.mxu0 %v58
    %v126 = vpop.f32.mrf.mxu0
    %v127 = vadd.f32 0.0, %v126
    %128 = vmatmul.f32.gmra.mxu0 %v59
    %v129 = vpop.f32.mrf.mxu0
    %v130 = vadd.f32 0.0, %v129
    %131 = vmatmul.f32.gmra.mxu0 %v60
    %v132 = vpop.f32.mrf.mxu0
    %v133 = vadd.f32 0.0, %v132
    %134 = vmatmul.f32.gmra.mxu0 %v61
    %v135 = vpop.f32.mrf.mxu0
    %v136 = vadd.f32 0.0, %v135
    %137 = vmatmul.f32.gmra.mxu0 %v62
    %v138 = vpop.f32.mrf.mxu0
    %v139 = vadd.f32 0.0, %v138
    %140 = vmatmul.f32.gmra.mxu0 %v63
    %v141 = vpop.f32.mrf.mxu0
    %v142 = vadd.f32 0.0, %v141
    %143 = vmatmul.f32.gmra.mxu0 %v64
    %v144 = vpop.f32.mrf.mxu0
    %v145 = vadd.f32 0.0, %v144
    %146 = vmatmul.f32.gmra.mxu0 %v65
    %v147 = vpop.f32.mrf.mxu0
    %v148 = vadd.f32 0.0, %v147
    %149 = vmatmul.f32.gmra.mxu0 %v66
    %v150 = vpop.f32.mrf.mxu0
    %v151 = vadd.f32 0.0, %v150
    %152 = vmatmul.f32.gmra.mxu0 %v67
    %v153 = vpop.f32.mrf.mxu0
    %v154 = vadd.f32 0.0, %v153
    %155 = vmatmul.f32.gmra.mxu0 %v68
    %v156 = vpop.f32.mrf.mxu0
    %v157 = vadd.f32 0.0, %v156
    %158 = vmatmul.f32.gmra.mxu0 %v69
    %v159 = vpop.f32.mrf.mxu0
    %v160 = vadd.f32 0.0, %v159
    %161 = vmatmul.f32.gmra.mxu0 %v70
    %v162 = vpop.f32.mrf.mxu0
    %v163 = vadd.f32 0.0, %v162
    %164 = vmatmul.f32.gmra.mxu0 %v71
    %v165 = vpop.f32.mrf.mxu0
    %v166 = vadd.f32 0.0, %v165
    %167 = vmatmul.f32.gmra.mxu0 %v72
    %v168 = vpop.f32.mrf.mxu0
    %v169 = vadd.f32 0.0, %v168
    %170 = vmatmul.f32.gmra.mxu0 %v73
    %v171 = vpop.f32.mrf.mxu0
    %v172 = vadd.f32 0.0, %v171
    %173 = vmatmul.f32.gmra.mxu0 %v74
    %v174 = vpop.f32.mrf.mxu0
    %v175 = vadd.f32 0.0, %v174
    %176 = vmatmul.f32.gmra.mxu0 %v75
    %v177 = vpop.f32.mrf.mxu0
    %v178 = vadd.f32 0.0, %v177
    %179 = vmatmul.f32.gmra.mxu0 %v76
    %v180 = vpop.f32.mrf.mxu0
    %v181 = vadd.f32 0.0, %v180
    %182 = vmatmul.f32.gmra.mxu0 %v77
    %v183 = vpop.f32.mrf.mxu0
    %v184 = vadd.f32 0.0, %v183
    %185 = vdwg.mxu0
    %p186 = scmp.eq.s32.totalorder 0, 0
    // Predicated region
    $region18: #{tpu_custom_call.1} parent=1 // pred_check
      %p187 = pneg %p186
    $region19: #{tpu_custom_call.1} parent=1 // pred_check_branch
      %189 = sbr.rel (%p187) target = $region21
    $region20: #{tpu_custom_call.1} parent=1 // pred_region
      %190 = vst [vmem:[#allocation7] sm:$0xff] 0.0
      %191 = vst [vmem:[#allocation8] sm:$0xff] 0.0
    $region21: #{tpu_custom_call.1} parent=1 // pred_fallthru
      _
    %v192 = vld [vmem:[#allocation7] sm:$0xff]
    %v193 = vadd.f32 %v112, %v115
    %v194 = vadd.f32 %v193, %v118
    %v195 = vadd.f32 %v194, %v121
    %v196 = vadd.f32 %v195, %v124
    %v197 = vadd.f32 %v196, %v127
    %v198 = vadd.f32 %v197, %v130
    %v199 = vadd.f32 %v198, %v133
    %v200 = vadd.f32 %v199, %v136
    %v201 = vadd.f32 %v200, %v139
    %v202 = vadd.f32 %v201, %v142
    %v203 = vadd.f32 %v202, %v145
    %v204 = vadd.f32 %v203, %v148
    %v205 = vadd.f32 %v204, %v151
    %v206 = vadd.f32 %v205, %v154
    %v207 = vadd.f32 %v206, %v157
    %v208 = vadd.f32 %v207, %v160
    %v209 = vadd.f32 %v208, %v163
    %v210 = vadd.f32 %v209, %v166
    %v211 = vadd.f32 %v210, %v169
    %v212 = vadd.f32 %v211, %v172
    %v213 = vadd.f32 %v212, %v175
    %v214 = vadd.f32 %v213, %v178
    %v215 = vadd.f32 %v214, %v181
    %v216 = vadd.f32 %v215, %v184
    %v217 = vadd.f32 %v192, %v216
    %218 = vst [vmem:[#allocation7] sm:$0xff] %v217
    %v219 = vld [vmem:[#allocation8] sm:$0xff]
    %v220 = vmul.f32 %v112, %v112
    %v221 = vmul.f32 %v115, %v115
    %v222 = vmul.f32 %v118, %v118
    %v223 = vmul.f32 %v121, %v121
    %v224 = vmul.f32 %v124, %v124
    %v225 = vmul.f32 %v127, %v127
    %v226 = vmul.f32 %v130, %v130
    %v227 = vmul.f32 %v133, %v133
    %v228 = vmul.f32 %v136, %v136
    %v229 = vmul.f32 %v139, %v139
    %v230 = vmul.f32 %v142, %v142
    %v231 = vmul.f32 %v145, %v145
    %v232 = vmul.f32 %v148, %v148
    %v233 = vmul.f32 %v151, %v151
    %v234 = vmul.f32 %v154, %v154
    %v235 = vmul.f32 %v157, %v157
    %v236 = vmul.f32 %v160, %v160
    %v237 = vmul.f32 %v163, %v163
    %v238 = vmul.f32 %v166, %v166
    %v239 = vmul.f32 %v169, %v169
    %v240 = vmul.f32 %v172, %v172
    %v241 = vmul.f32 %v175, %v175
    %v242 = vmul.f32 %v178, %v178
    %v243 = vmul.f32 %v181, %v181
    %v244 = vmul.f32 %v184, %v184
    %v245 = vadd.f32 %v220, %v221
    %v246 = vadd.f32 %v245, %v222
    %v247 = vadd.f32 %v246, %v223
    %v248 = vadd.f32 %v247, %v224
    %v249 = vadd.f32 %v248, %v225
    %v250 = vadd.f32 %v249, %v226
    %v251 = vadd.f32 %v250, %v227
    %v252 = vadd.f32 %v251, %v228
    %v253 = vadd.f32 %v252, %v229
    %v254 = vadd.f32 %v253, %v230
    %v255 = vadd.f32 %v254, %v231
    %v256 = vadd.f32 %v255, %v232
    %v257 = vadd.f32 %v256, %v233
    %v258 = vadd.f32 %v257, %v234
    %v259 = vadd.f32 %v258, %v235
    %v260 = vadd.f32 %v259, %v236
    %v261 = vadd.f32 %v260, %v237
    %v262 = vadd.f32 %v261, %v238
    %v263 = vadd.f32 %v262, %v239
    %v264 = vadd.f32 %v263, %v240
    %v265 = vadd.f32 %v264, %v241
    %v266 = vadd.f32 %v265, %v242
    %v267 = vadd.f32 %v266, %v243
    %v268 = vadd.f32 %v267, %v244
    %v269 = vadd.f32 %v219, %v268
    %270 = vst [vmem:[#allocation8] sm:$0xff] %v269
    // Predicated region
    $region22: #{tpu_custom_call.1} parent=1 // pred_check
      _
    $region23: #{tpu_custom_call.1} parent=1 // pred_check_branch
      %272 = sbr.rel (0) target = $region25
    $region24: #{tpu_custom_call.1} parent=1 // pred_region
      %274 = vsyncadd [#allocation4], 0
      %s276 = sshll.u32 [#allocation7], 4
      %s277 = int_to_ptr.vmem [resolvable:$true] %s276
      %s278 = sshll.u32 %s2, 4
      %s279 = int_to_ptr.hbm [resolvable:$true] %s278
      %281 = dma.vmem_to_hbm [thread:$0]  %s277, 128, %s279, [#allocation4]
    $region25: #{tpu_custom_call.1} parent=1 // pred_fallthru
      _
    // Predicated region
    $region26: #{tpu_custom_call.1} parent=1 // pred_check
      _
    $region27: #{tpu_custom_call.1} parent=1 // pred_check_branch
      %283 = sbr.rel (0) target = $region29
    $region28: #{tpu_custom_call.1} parent=1 // pred_region
      %285 = vsyncadd [#allocation9], 0
      %s287 = sshll.u32 [#allocation8], 4
      %s288 = int_to_ptr.vmem [resolvable:$true] %s287
      %s289 = sshll.u32 %s3, 4
      %s290 = int_to_ptr.hbm [resolvable:$true] %s289
      %292 = dma.vmem_to_hbm [thread:$0]  %s288, 128, %s290, [#allocation9]
    $region29: #{tpu_custom_call.1} parent=1 // pred_fallthru
      _
    // Predicated region
    $region30: #{tpu_custom_call.1} parent=1 // pred_check
      _
    $region31: #{tpu_custom_call.1} parent=1 // pred_check_branch
      %294 = sbr.rel (0) target = $region33
    $region32: #{tpu_custom_call.1} parent=1 // pred_region
      %296 = dma.done [#allocation4], 128
    $region33: #{tpu_custom_call.1} parent=1 // pred_fallthru
      _
    // Predicated region
    $region34: #{tpu_custom_call.1} parent=1 // pred_check
      _
    $region35: #{tpu_custom_call.1} parent=1 // pred_check_branch
      %298 = sbr.rel (0) target = $region37
    $region36: #{tpu_custom_call.1} parent=1 // pred_region
      %300 = dma.done [#allocation9], 128
    $region37: #{tpu_custom_call.1} parent=1 // pred_fallthru
      _
    %301 = vsyncpa [#allocation3], 1
    %302 = vsyncpa [#allocation6], 1
    %303 = vsyncpa [#allocation4], 1
    %304 = vsyncpa [#allocation9], 1

</llo_original>
